<compile_context>
chip_gen: v5e
topology: v5e:2x2
jax: 0.10.0
libtpu: 0.0.40
codegen_flags: <defaults>
</compile_context>

<pallas_src>
import functools

import jax
import jax.numpy as jnp
from jax.experimental import pallas as pl
from jax.experimental.pallas import tpu as pltpu


def _round_up(x, m):
    return ((x + m - 1) // m) * m


def _decoder_kernel(SOS, EOS, PAD, n, d_h, n_layers, V, max_len,
                    z_ref, wz_ref, bz_ref, emb_ref, w0_ref, b0_ref,
                    wl_ref, bl_ref, wv_ref, bv_ref,
                    xgen_ref, slen_ref,
                    h_scr, xt_scr, eos_scr):
    # ---- t = 0 : initialize state and outputs ----
    h0 = (jnp.dot(z_ref[...], wz_ref[...],
                  preferred_element_type=jnp.float32) + bz_ref[...])
    for l in range(n_layers):
        h_scr[l] = h0                                   # H_0 repeated per layer
    xt_scr[...] = jnp.full((1, n), SOS, jnp.int32)
    eos_scr[...] = jnp.zeros((1, n), jnp.int32)
    slen_ref[...] = jnp.full((1, n), max_len, jnp.int32)
    rows = jax.lax.broadcasted_iota(jnp.int32, (max_len, n), 0)
    xgen_ref[...] = jnp.where(rows == 0, SOS, PAD).astype(jnp.int32)

    # Built once, reused every step for the one-hot AND the argmax tie-break.
    vidx = jax.lax.broadcasted_iota(jnp.int32, (n, V), 1)

    # ---- decode steps t = 1 .. max_len-1 (single sequential in-kernel loop) ----
    @pl.loop(1, max_len)
    def _step(t):
        # Early exit: once every row has emitted EOS the remaining steps write
        # nothing (identical to the PyTorch loop, which masks all writes).
        @pl.when(jnp.any(eos_scr[...] == 0))
        def _():
            xt = xt_scr[...][0]                         # (n,)  int32
            eos_prev = eos_scr[...][0]                  # (n,)  0/1

            # Embedding lookup as one-hot @ table (single MXU push; V is
            # lane-padded to a multiple of 128).
            oh = (xt[:, None] == vidx).astype(jnp.bfloat16)        # (n, V)
            x_in = jnp.dot(oh, emb_ref[...],
                           preferred_element_type=jnp.float32)     # (n, d_emb)

            for l in range(n_layers):                   # static unroll
                h = h_scr[l]                            # (n, d_h) f32
                xh = jnp.concatenate([x_in, h], axis=1).astype(jnp.bfloat16)
                if l == 0:
                    w, b = w0_ref[...], b0_ref[...]
                else:
                    w, b = wl_ref[l - 1], bl_ref[l - 1]
                # One fused matmul per layer: columns = [r | z | n_in | n_hid].
                g = jnp.dot(xh, w, preferred_element_type=jnp.float32) + b
                r = jax.nn.sigmoid(g[:, 0:d_h])
                zg = jax.nn.sigmoid(g[:, d_h:2 * d_h])
                ng = jnp.tanh(g[:, 2 * d_h:3 * d_h] + r * g[:, 3 * d_h:4 * d_h])
                h_new = (1.0 - zg) * ng + zg * h
                h_scr[l] = h_new
                x_in = h_new
                # torch GRU inter-layer dropout is a no-op at inference.

            # h2v; softmax dropped — argmax is invariant under softmax.
            logits = (jnp.dot(x_in.astype(jnp.bfloat16), wv_ref[...],
                              preferred_element_type=jnp.float32) + bv_ref[...])
            lmax = jnp.max(logits, axis=-1, keepdims=True)
            x_new = jnp.min(jnp.where(logits == lmax, vidx, V), axis=-1)
            x_new = x_new.astype(jnp.int32)             # (n,) greedy sample

            row = jnp.where(eos_prev == 1, jnp.int32(PAD), x_new)
            xgen_ref[pl.ds(t, 1), :] = row[None, :]

            newly = jnp.logical_and(eos_prev == 0, x_new == EOS)
            slen_ref[...] = jnp.where(newly[None, :], t + 1, slen_ref[...])
            eos_scr[...] = jnp.where(newly[None, :], jnp.int32(1), eos_scr[...])
            xt_scr[...] = x_new[None, :]


def rnn_decoder_forward(packed, Z, *, SOS, EOS, PAD, max_len, n_layers):
    n = Z.shape[0]
    d_hp = packed["wz"].shape[1]          # padded hidden dim (4*d_hp % 128 == 0)
    V_p = packed["wv"].shape[1]           # padded vocab (multiple of 128)

    kernel = functools.partial(_decoder_kernel, SOS, EOS, PAD, n, d_hp,
                               n_layers, V_p, max_len)

    xgen_T, seq_lens = pl.pallas_call(
        kernel,
        out_shape=(jax.ShapeDtypeStruct((max_len, n), jnp.int32),
                   jax.ShapeDtypeStruct((1, n), jnp.int32)),
        scratch_shapes=[
            pltpu.VMEM((n_layers, n, d_hp), jnp.float32),   # H_t (per layer)
            pltpu.VMEM((1, n), jnp.int32),                  # x_t
            pltpu.VMEM((1, n), jnp.int32),                  # eos_mask
        ],
    )(Z, packed["wz"], packed["bz"], packed["emb"], packed["w0"], packed["b0"],
      packed["wl"], packed["bl"], packed["wv"], packed["bv"])

    # (time, batch) -> (batch, max_len); seq_lens -> (batch,)
    return xgen_T.T, seq_lens[0]
    # TODO(synk): PyTorch returns a ragged list X_gen[i, :seq_lens[i]];
    # JAX has no ragged arrays, so we return the padded matrix + lengths.


def init_params(key, V, d_emb, d_z, d_h, n_layers, PAD):
    """Torch-layout parameters, pre-transposed for right-multiplication."""
    ks = jax.random.split(key, 9)
    s = 0.1
    emb = s * jax.random.normal(ks[0], (V, d_emb), jnp.float32)
    emb = emb.at[PAD].set(0.0)                          # padding_idx row = 0
    wz = s * jax.random.normal(ks[1], (d_z, d_h), jnp.float32)
    bz = s * jax.random.normal(ks[2], (1, d_h), jnp.float32)
    wih, whh = [], []
    for l in range(n_layers):
        d_in = d_emb if l == 0 else d_h
        wih.append(s * jax.random.normal(jax.random.fold_in(ks[3], l),
                                         (d_in, 3 * d_h), jnp.float32))
        whh.append(s * jax.random.normal(jax.random.fold_in(ks[5], l),
                                         (d_h, 3 * d_h), jnp.float32))
    bih = s * jax.random.normal(ks[4], (n_layers, 3 * d_h), jnp.float32)
    bhh = s * jax.random.normal(ks[6], (n_layers, 3 * d_h), jnp.float32)
    wv = s * jax.random.normal(ks[7], (d_h, V), jnp.float32)
    bv = s * jax.random.normal(ks[8], (1, V), jnp.float32)
    return dict(emb=emb, wz=wz, bz=bz, wih=wih, bih=bih, whh=whh, bhh=bhh,
                wv=wv, bv=bv)


def pack_params(params, *, d_h, V, n_layers):
    """Pad to lane-dense shapes and fuse W_ih/W_hh into one matmul per layer.

    Fused gate columns (each block d_hp wide): [r | z | n_input | n_hidden]
        r = sigmoid(G0); z = sigmoid(G1); n = tanh(G2 + r*G3); h' = (1-z)n + z h
    Fused bias: [b_ir+b_hr | b_iz+b_hz | b_in | b_hn].
    """
    d_hp = _round_up(d_h, 32)       # 4*d_hp is a multiple of 128 (lane-dense)
    V_p = _round_up(V, 128)         # lane-dense vocab
    f32 = jnp.float32

    def pad_cols(a, cols):
        return jnp.pad(a, ((0, 0), (0, cols - a.shape[1])))

    wz = pad_cols(params["wz"], d_hp).astype(f32)
    bz = pad_cols(params["bz"], d_hp).astype(f32)
    emb = jnp.pad(params["emb"], ((0, V_p - V), (0, 0))).astype(jnp.bfloat16)

    w_cat, b_cat = [], []
    for l in range(n_layers):
        wih, whh = params["wih"][l], params["whh"][l]
        bih, bhh = params["bih"][l], params["bhh"][l]
        if l > 0:                       # layer input is the (padded) hidden state
            wih = jnp.pad(wih, ((0, d_hp - d_h), (0, 0)))
        whh = jnp.pad(whh, ((0, d_hp - d_h), (0, 0)))
        d_in_p = wih.shape[0]

        def gate_blocks(w):
            return [pad_cols(w[:, k * d_h:(k + 1) * d_h], d_hp) for k in range(3)]

        wir, wiz, win = gate_blocks(wih)
        whr, whz, whn = gate_blocks(whh)
        top = jnp.concatenate([wir, wiz, win,
                               jnp.zeros((d_in_p, d_hp), f32)], axis=1)
        bot = jnp.concatenate([whr, whz,
                               jnp.zeros((d_hp, d_hp), f32), whn], axis=1)
        w_cat.append(jnp.concatenate([top, bot], axis=0).astype(jnp.bfloat16))

        def pad_b(b):
            return jnp.pad(b, (0, d_hp - d_h))

        b_cat.append(jnp.concatenate([
            pad_b(bih[0:d_h] + bhh[0:d_h]),
            pad_b(bih[d_h:2 * d_h] + bhh[d_h:2 * d_h]),
            pad_b(bih[2 * d_h:3 * d_h]),
            pad_b(bhh[2 * d_h:3 * d_h]),
        ])[None, :].astype(f32))

    if n_layers > 1:
        wl = jnp.stack(w_cat[1:])
        bl = jnp.stack(b_cat[1:])
    else:  # dummy (unused) so the kernel signature stays fixed
        wl = jnp.zeros((1, 2 * d_hp, 4 * d_hp), jnp.bfloat16)
        bl = jnp.zeros((1, 1, 4 * d_hp), f32)

    wv = jnp.pad(params["wv"], ((0, d_hp - d_h), (0, V_p - V))).astype(jnp.bfloat16)
    bv = jnp.pad(params["bv"], ((0, 0), (0, V_p - V)))
    col = jax.lax.broadcasted_iota(jnp.int32, (1, V_p), 1)
    bv = jnp.where(col < V, bv, -1e30).astype(f32)   # padded vocab never wins argmax

    return dict(wz=wz, bz=bz, emb=emb, w0=w_cat[0], b0=b_cat[0],
                wl=wl, bl=bl, wv=wv, bv=bv)


if __name__ == "__main__":
    SOS, EOS, PAD = 1, 2, 0
    n, d_z, d_emb, d_h, n_layers, V, max_len = 8, 16, 16, 32, 3, 32, 12

    key = jax.random.PRNGKey(0)
    kp, kz = jax.random.split(key)
    params = init_params(kp, V, d_emb, d_z, d_h, n_layers, PAD)
    packed = pack_params(params, d_h=d_h, V=V, n_layers=n_layers)
    Z = jax.random.normal(kz, (n, d_z), jnp.float32)

    x_gen, seq_lens = rnn_decoder_forward(packed, Z, SOS=SOS, EOS=EOS, PAD=PAD,
                                          max_len=max_len, n_layers=n_layers)
    x_gen = jax.block_until_ready(x_gen)
    seq_lens = jax.block_until_ready(seq_lens)

    assert x_gen.shape == (n, max_len) and x_gen.dtype == jnp.int32
    assert seq_lens.shape == (n,) and seq_lens.dtype == jnp.int32
    assert bool(jnp.all(x_gen[:, 0] == SOS))
    assert bool(jnp.all((x_gen >= 0) & (x_gen < V)))
    assert bool(jnp.all((seq_lens >= 1) & (seq_lens <= max_len)))

    print("KERNEL_OK")
</pallas_src>

<mosaic_0001>
module attributes {stable_mosaic.version = 11 : i64} {
  func.func @_decoder_kernel(%arg0: memref<8x16xf32, #tpu.memory_space<vmem>>, %arg1: memref<16x32xf32, #tpu.memory_space<vmem>>, %arg2: memref<1x32xf32, #tpu.memory_space<vmem>>, %arg3: memref<128x16xbf16, #tpu.memory_space<vmem>>, %arg4: memref<48x128xbf16, #tpu.memory_space<vmem>>, %arg5: memref<1x128xf32, #tpu.memory_space<vmem>>, %arg6: memref<2x64x128xbf16, #tpu.memory_space<vmem>>, %arg7: memref<2x1x128xf32, #tpu.memory_space<vmem>>, %arg8: memref<32x128xbf16, #tpu.memory_space<vmem>>, %arg9: memref<1x128xf32, #tpu.memory_space<vmem>>, %arg10: memref<12x8xi32, #tpu.memory_space<vmem>>, %arg11: memref<1x8xi32, #tpu.memory_space<vmem>>, %arg12: memref<3x8x32xf32, #tpu.memory_space<vmem>>, %arg13: memref<1x8xi32, #tpu.memory_space<vmem>>, %arg14: memref<1x8xi32, #tpu.memory_space<vmem>>) attributes {dimension_semantics = [], scalar_prefetch = 0 : i64, scratch_operands = 3 : i64, tpu.core_type = #tpu.core_type<tc>} {
    %c0 = arith.constant 0 : index
    %c0_0 = arith.constant 0 : index
    %0 = vector.load %arg0[%c0, %c0_0] : memref<8x16xf32, #tpu.memory_space<vmem>>, vector<8x16xf32>
    %c0_1 = arith.constant 0 : index
    %c0_2 = arith.constant 0 : index
    %1 = vector.load %arg1[%c0_1, %c0_2] : memref<16x32xf32, #tpu.memory_space<vmem>>, vector<16x32xf32>
    %cst = arith.constant dense<0.000000e+00> : vector<8x32xf32>
    %2 = tpu.matmul %0, %1, %cst {dimension_numbers = #tpu.dot_dimension_numbers<[1], [0], [0], [1], [0, 0, 1, 1], [], []>} : vector<8x16xf32>, vector<16x32xf32>, vector<8x32xf32> -> vector<8x32xf32>
    %c0_3 = arith.constant 0 : index
    %c0_4 = arith.constant 0 : index
    %3 = vector.load %arg2[%c0_3, %c0_4] : memref<1x32xf32, #tpu.memory_space<vmem>>, vector<1x32xf32>
    %4 = vector.broadcast %3 : vector<1x32xf32> to vector<8x32xf32>
    %5 = arith.addf %2, %4 : vector<8x32xf32>
    %c0_5 = arith.constant 0 : index
    %c0_6 = arith.constant 0 : index
    %c0_7 = arith.constant 0 : index
    %6 = vector.load %arg12[%c0_5, %c0_6, %c0_7] : memref<3x8x32xf32, #tpu.memory_space<vmem>>, vector<1x8x32xf32>
    %7 = vector.shape_cast %6 : vector<1x8x32xf32> to vector<8x32xf32>
    %8 = vector.shape_cast %5 : vector<8x32xf32> to vector<1x8x32xf32>
    tpu.vector_store %arg12[%c0_5, %c0_6, %c0_7], %8 {strides = array<i32>} : memref<3x8x32xf32, #tpu.memory_space<vmem>>, vector<1x8x32xf32>,
    %c1 = arith.constant 1 : index
    %c0_8 = arith.constant 0 : index
    %c0_9 = arith.constant 0 : index
    %9 = vector.load %arg12[%c1, %c0_8, %c0_9] : memref<3x8x32xf32, #tpu.memory_space<vmem>>, vector<1x8x32xf32>
    %10 = vector.shape_cast %9 : vector<1x8x32xf32> to vector<8x32xf32>
    %11 = vector.shape_cast %5 : vector<8x32xf32> to vector<1x8x32xf32>
    tpu.vector_store %arg12[%c1, %c0_8, %c0_9], %11 {strides = array<i32>} : memref<3x8x32xf32, #tpu.memory_space<vmem>>, vector<1x8x32xf32>,
    %c2 = arith.constant 2 : index
    %c0_10 = arith.constant 0 : index
    %c0_11 = arith.constant 0 : index
    %12 = vector.load %arg12[%c2, %c0_10, %c0_11] : memref<3x8x32xf32, #tpu.memory_space<vmem>>, vector<1x8x32xf32>
    %13 = vector.shape_cast %12 : vector<1x8x32xf32> to vector<8x32xf32>
    %14 = vector.shape_cast %5 : vector<8x32xf32> to vector<1x8x32xf32>
    tpu.vector_store %arg12[%c2, %c0_10, %c0_11], %14 {strides = array<i32>} : memref<3x8x32xf32, #tpu.memory_space<vmem>>, vector<1x8x32xf32>,
    %c1_i32 = arith.constant 1 : i32
    %15 = vector.broadcast %c1_i32 : i32 to vector<1x8xi32>
    %c0_12 = arith.constant 0 : index
    %c0_13 = arith.constant 0 : index
    %16 = vector.load %arg13[%c0_12, %c0_13] : memref<1x8xi32, #tpu.memory_space<vmem>>, vector<1x8xi32>
    tpu.vector_store %arg13[%c0_12, %c0_13], %15 {strides = array<i32>} : memref<1x8xi32, #tpu.memory_space<vmem>>, vector<1x8xi32>,
    %c0_i32 = arith.constant 0 : i32
    %17 = vector.broadcast %c0_i32 : i32 to vector<1x8xi32>
    %c0_14 = arith.constant 0 : index
    %c0_15 = arith.constant 0 : index
    %18 = vector.load %arg14[%c0_14, %c0_15] : memref<1x8xi32, #tpu.memory_space<vmem>>, vector<1x8xi32>
    tpu.vector_store %arg14[%c0_14, %c0_15], %17 {strides = array<i32>} : memref<1x8xi32, #tpu.memory_space<vmem>>, vector<1x8xi32>,
    %c12_i32 = arith.constant 12 : i32
    %19 = vector.broadcast %c12_i32 : i32 to vector<1x8xi32>
    %c0_16 = arith.constant 0 : index
    %c0_17 = arith.constant 0 : index
    %20 = vector.load %arg11[%c0_16, %c0_17] : memref<1x8xi32, #tpu.memory_space<vmem>>, vector<1x8xi32>
    tpu.vector_store %arg11[%c0_16, %c0_17], %19 {strides = array<i32>} : memref<1x8xi32, #tpu.memory_space<vmem>>, vector<1x8xi32>,
    %21 = tpu.iota {dimensions = array<i32: 0>} : vector<12x8xi32>
    %c0_i32_18 = arith.constant 0 : i32
    %22 = vector.broadcast %c0_i32_18 : i32 to vector<12x8xi32>
    %23 = arith.cmpi eq, %21, %22 : vector<12x8xi32>
    %c1_i32_19 = arith.constant 1 : i32
    %c0_i32_20 = arith.constant 0 : i32
    %24 = vector.broadcast %c1_i32_19 : i32 to vector<12x8xi32>
    %25 = vector.broadcast %c0_i32_20 : i32 to vector<12x8xi32>
    %26 = arith.select %23, %24, %25 : vector<12x8xi1>, vector<12x8xi32>
    %c0_21 = arith.constant 0 : index
    %c0_22 = arith.constant 0 : index
    %27 = vector.load %arg10[%c0_21, %c0_22] : memref<12x8xi32, #tpu.memory_space<vmem>>, vector<12x8xi32>
    tpu.vector_store %arg10[%c0_21, %c0_22], %26 {strides = array<i32>} : memref<12x8xi32, #tpu.memory_space<vmem>>, vector<12x8xi32>,
    %28 = tpu.iota {dimensions = array<i32: 1>} : vector<8x128xi32>
    %c0_i32_23 = arith.constant 0 : i32
    %c11_i32 = arith.constant 11 : i32
    %29 = arith.addi %c0_i32_23, %c11_i32 : i32
    %c1_i32_24 = arith.constant 1 : i32
    scf.for %arg15 = %c0_i32_23 to %29 step %c1_i32_24  : i32 {
      %c1_i32_26 = arith.constant 1 : i32
      %30 = arith.muli %arg15, %c1_i32_26 : i32
      %c1_i32_27 = arith.constant 1 : i32
      %31 = arith.addi %c1_i32_27, %30 : i32
      %c0_28 = arith.constant 0 : index
      %c0_29 = arith.constant 0 : index
      %32 = vector.load %arg14[%c0_28, %c0_29] : memref<1x8xi32, #tpu.memory_space<vmem>>, vector<1x8xi32>
      %c0_i32_30 = arith.constant 0 : i32
      %33 = vector.broadcast %c0_i32_30 : i32 to vector<1x8xi32>
      %34 = arith.cmpi eq, %32, %33 : vector<1x8xi32>
      %cst_31 = arith.constant 1.000000e+00 : f32
      %cst_32 = arith.constant 0.000000e+00 : f32
      %35 = vector.broadcast %cst_31 : f32 to vector<1x8xf32>
      %36 = vector.broadcast %cst_32 : f32 to vector<1x8xf32>
      %37 = arith.select %34, %35, %36 : vector<1x8xi1>, vector<1x8xf32>
      %38 = vector.shape_cast %37 : vector<1x8xf32> to vector<1x1x8xf32>
      %cst_33 = arith.constant dense<0xFF800000> : vector<1xf32>
      %39 = vector.multi_reduction <maximumf>, %38, %cst_33 [1, 2] : vector<1x1x8xf32> to vector<1xf32>
      %40 = vector.shape_cast %39 : vector<1xf32> to vector<1x1x1xf32>
      %41 = vector.extract %40[0, 0, 0] : f32 from vector<1x1x1xf32>
      %cst_34 = arith.constant 0.000000e+00 : f32
      %42 = arith.cmpf ogt, %41, %cst_34 : f32
      %43 = arith.extui %42 : i1 to i32
      %c0_i32_35 = arith.constant 0 : i32
      %44 = arith.cmpi ne, %43, %c0_i32_35 : i32
      scf.if %44 {
        %c0_36 = arith.constant 0 : index
        %c0_37 = arith.constant 0 : index
        %45 = vector.load %arg13[%c0_36, %c0_37] : memref<1x8xi32, #tpu.memory_space<vmem>>, vector<1x8xi32>
        %46 = vector.shape_cast %45 : vector<1x8xi32> to vector<8xi32>
        %c0_38 = arith.constant 0 : index
        %c0_39 = arith.constant 0 : index
        %47 = vector.load %arg14[%c0_38, %c0_39] : memref<1x8xi32, #tpu.memory_space<vmem>>, vector<1x8xi32>
        %48 = vector.shape_cast %47 : vector<1x8xi32> to vector<8xi32>
        %49 = vector.shape_cast %46 : vector<8xi32> to vector<8x1xi32>
        %50 = vector.broadcast %49 : vector<8x1xi32> to vector<8x128xi32>
        %51 = arith.cmpi eq, %50, %28 : vector<8x128xi32>
        %52 = arith.extui %51 : vector<8x128xi1> to vector<8x128xi32>
        %53 = arith.sitofp %52 : vector<8x128xi32> to vector<8x128xf32>
        %54 = arith.truncf %53 : vector<8x128xf32> to vector<8x128xbf16>
        %c0_40 = arith.constant 0 : index
        %c0_41 = arith.constant 0 : index
        %55 = vector.load %arg3[%c0_40, %c0_41] : memref<128x16xbf16, #tpu.memory_space<vmem>>, vector<128x16xbf16>
        %cst_42 = arith.constant dense<0.000000e+00> : vector<8x16xf32>
        %56 = tpu.matmul %54, %55, %cst_42 {dimension_numbers = #tpu.dot_dimension_numbers<[1], [0], [0], [1], [0, 0, 1, 1], [], []>} : vector<8x128xbf16>, vector<128x16xbf16>, vector<8x16xf32> -> vector<8x16xf32>
        %c0_43 = arith.constant 0 : index
        %c0_44 = arith.constant 0 : index
        %c0_45 = arith.constant 0 : index
        %57 = vector.load %arg12[%c0_43, %c0_44, %c0_45] : memref<3x8x32xf32, #tpu.memory_space<vmem>>, vector<1x8x32xf32>
        %58 = vector.shape_cast %57 : vector<1x8x32xf32> to vector<8x32xf32>
        %59 = tpu.concatenate %56, %58 in 1 : vector<8x16xf32>, vector<8x32xf32> -> vector<8x48xf32>
        %60 = arith.truncf %59 : vector<8x48xf32> to vector<8x48xbf16>
        %c0_46 = arith.constant 0 : index
        %c0_47 = arith.constant 0 : index
        %61 = vector.load %arg4[%c0_46, %c0_47] : memref<48x128xbf16, #tpu.memory_space<vmem>>, vector<48x128xbf16>
        %c0_48 = arith.constant 0 : index
        %c0_49 = arith.constant 0 : index
        %62 = vector.load %arg5[%c0_48, %c0_49] : memref<1x128xf32, #tpu.memory_space<vmem>>, vector<1x128xf32>
        %cst_50 = arith.constant dense<0.000000e+00> : vector<8x128xf32>
        %63 = tpu.matmul %60, %61, %cst_50 {dimension_numbers = #tpu.dot_dimension_numbers<[1], [0], [0], [1], [0, 0, 1, 1], [], []>} : vector<8x48xbf16>, vector<48x128xbf16>, vector<8x128xf32> -> vector<8x128xf32>
        %64 = vector.broadcast %62 : vector<1x128xf32> to vector<8x128xf32>
        %65 = arith.addf %63, %64 : vector<8x128xf32>
        %66 = vector.extract_strided_slice %65 {offsets = [0, 0], sizes = [8, 32], strides = [1, 1]} : vector<8x128xf32> to vector<8x32xf32>
        %67 = arith.negf %66 : vector<8x32xf32>
        %68 = math.exp %67 : vector<8x32xf32>
        %cst_51 = arith.constant 1.000000e+00 : f32
        %69 = vector.broadcast %cst_51 : f32 to vector<8x32xf32>
        %70 = arith.addf %69, %68 : vector<8x32xf32>
        %71 = arith.divf %69, %70 : vector<8x32xf32>
        %72 = vector.extract_strided_slice %65 {offsets = [0, 32], sizes = [8, 32], strides = [1, 1]} : vector<8x128xf32> to vector<8x32xf32>
        %73 = arith.negf %72 : vector<8x32xf32>
        %74 = math.exp %73 : vector<8x32xf32>
        %cst_52 = arith.constant 1.000000e+00 : f32
        %75 = vector.broadcast %cst_52 : f32 to vector<8x32xf32>
        %76 = arith.addf %75, %74 : vector<8x32xf32>
        %77 = arith.divf %75, %76 : vector<8x32xf32>
        %78 = vector.extract_strided_slice %65 {offsets = [0, 64], sizes = [8, 32], strides = [1, 1]} : vector<8x128xf32> to vector<8x32xf32>
        %79 = vector.extract_strided_slice %65 {offsets = [0, 96], sizes = [8, 32], strides = [1, 1]} : vector<8x128xf32> to vector<8x32xf32>
        %80 = arith.mulf %71, %79 : vector<8x32xf32>
        %81 = arith.addf %78, %80 : vector<8x32xf32>
        %82 = math.tanh %81 : vector<8x32xf32>
        %cst_53 = arith.constant 1.000000e+00 : f32
        %83 = vector.broadcast %cst_53 : f32 to vector<8x32xf32>
        %84 = arith.subf %83, %77 : vector<8x32xf32>
        %85 = arith.mulf %84, %82 : vector<8x32xf32>
        %86 = arith.mulf %77, %58 : vector<8x32xf32>
        %87 = arith.addf %85, %86 : vector<8x32xf32>
        %c0_54 = arith.constant 0 : index
        %c0_55 = arith.constant 0 : index
        %c0_56 = arith.constant 0 : index
        %88 = vector.load %arg12[%c0_54, %c0_55, %c0_56] : memref<3x8x32xf32, #tpu.memory_space<vmem>>, vector<1x8x32xf32>
        %89 = vector.shape_cast %88 : vector<1x8x32xf32> to vector<8x32xf32>
        %90 = vector.shape_cast %87 : vector<8x32xf32> to vector<1x8x32xf32>
        tpu.vector_store %arg12[%c0_54, %c0_55, %c0_56], %90 {strides = array<i32>} : memref<3x8x32xf32, #tpu.memory_space<vmem>>, vector<1x8x32xf32>,
        %c1_57 = arith.constant 1 : index
        %c0_58 = arith.constant 0 : index
        %c0_59 = arith.constant 0 : index
        %91 = vector.load %arg12[%c1_57, %c0_58, %c0_59] : memref<3x8x32xf32, #tpu.memory_space<vmem>>, vector<1x8x32xf32>
        %92 = vector.shape_cast %91 : vector<1x8x32xf32> to vector<8x32xf32>
        %93 = tpu.concatenate %87, %92 in 1 : vector<8x32xf32>, vector<8x32xf32> -> vector<8x64xf32>
        %94 = arith.truncf %93 : vector<8x64xf32> to vector<8x64xbf16>
        %c0_60 = arith.constant 0 : index
        %c0_61 = arith.constant 0 : index
        %c0_62 = arith.constant 0 : index
        %95 = vector.load %arg6[%c0_60, %c0_61, %c0_62] : memref<2x64x128xbf16, #tpu.memory_space<vmem>>, vector<1x64x128xbf16>
        %96 = vector.shape_cast %95 : vector<1x64x128xbf16> to vector<64x128xbf16>
        %c0_63 = arith.constant 0 : index
        %c0_64 = arith.constant 0 : index
        %c0_65 = arith.constant 0 : index
        %97 = vector.load %arg7[%c0_63, %c0_64, %c0_65] : memref<2x1x128xf32, #tpu.memory_space<vmem>>, vector<1x1x128xf32>
        %98 = vector.shape_cast %97 : vector<1x1x128xf32> to vector<1x128xf32>
        %cst_66 = arith.constant dense<0.000000e+00> : vector<8x128xf32>
        %99 = tpu.matmul %94, %96, %cst_66 {dimension_numbers = #tpu.dot_dimension_numbers<[1], [0], [0], [1], [0, 0, 1, 1], [], []>} : vector<8x64xbf16>, vector<64x128xbf16>, vector<8x128xf32> -> vector<8x128xf32>
        %100 = vector.broadcast %98 : vector<1x128xf32> to vector<8x128xf32>
        %101 = arith.addf %99, %100 : vector<8x128xf32>
        %102 = vector.extract_strided_slice %101 {offsets = [0, 0], sizes = [8, 32], strides = [1, 1]} : vector<8x128xf32> to vector<8x32xf32>
        %103 = arith.negf %102 : vector<8x32xf32>
        %104 = math.exp %103 : vector<8x32xf32>
        %cst_67 = arith.constant 1.000000e+00 : f32
        %105 = vector.broadcast %cst_67 : f32 to vector<8x32xf32>
        %106 = arith.addf %105, %104 : vector<8x32xf32>
        %107 = arith.divf %105, %106 : vector<8x32xf32>
        %108 = vector.extract_strided_slice %101 {offsets = [0, 32], sizes = [8, 32], strides = [1, 1]} : vector<8x128xf32> to vector<8x32xf32>
        %109 = arith.negf %108 : vector<8x32xf32>
        %110 = math.exp %109 : vector<8x32xf32>
        %cst_68 = arith.constant 1.000000e+00 : f32
        %111 = vector.broadcast %cst_68 : f32 to vector<8x32xf32>
        %112 = arith.addf %111, %110 : vector<8x32xf32>
        %113 = arith.divf %111, %112 : vector<8x32xf32>
        %114 = vector.extract_strided_slice %101 {offsets = [0, 64], sizes = [8, 32], strides = [1, 1]} : vector<8x128xf32> to vector<8x32xf32>
        %115 = vector.extract_strided_slice %101 {offsets = [0, 96], sizes = [8, 32], strides = [1, 1]} : vector<8x128xf32> to vector<8x32xf32>
        %116 = arith.mulf %107, %115 : vector<8x32xf32>
        %117 = arith.addf %114, %116 : vector<8x32xf32>
        %118 = math.tanh %117 : vector<8x32xf32>
        %cst_69 = arith.constant 1.000000e+00 : f32
        %119 = vector.broadcast %cst_69 : f32 to vector<8x32xf32>
        %120 = arith.subf %119, %113 : vector<8x32xf32>
        %121 = arith.mulf %120, %118 : vector<8x32xf32>
        %122 = arith.mulf %113, %92 : vector<8x32xf32>
        %123 = arith.addf %121, %122 : vector<8x32xf32>
        %c1_70 = arith.constant 1 : index
        %c0_71 = arith.constant 0 : index
        %c0_72 = arith.constant 0 : index
        %124 = vector.load %arg12[%c1_70, %c0_71, %c0_72] : memref<3x8x32xf32, #tpu.memory_space<vmem>>, vector<1x8x32xf32>
        %125 = vector.shape_cast %124 : vector<1x8x32xf32> to vector<8x32xf32>
        %126 = vector.shape_cast %123 : vector<8x32xf32> to vector<1x8x32xf32>
        tpu.vector_store %arg12[%c1_70, %c0_71, %c0_72], %126 {strides = array<i32>} : memref<3x8x32xf32, #tpu.memory_space<vmem>>, vector<1x8x32xf32>,
        %c2_73 = arith.constant 2 : index
        %c0_74 = arith.constant 0 : index
        %c0_75 = arith.constant 0 : index
        %127 = vector.load %arg12[%c2_73, %c0_74, %c0_75] : memref<3x8x32xf32, #tpu.memory_space<vmem>>, vector<1x8x32xf32>
        %128 = vector.shape_cast %127 : vector<1x8x32xf32> to vector<8x32xf32>
        %129 = tpu.concatenate %123, %128 in 1 : vector<8x32xf32>, vector<8x32xf32> -> vector<8x64xf32>
        %130 = arith.truncf %129 : vector<8x64xf32> to vector<8x64xbf16>
        %c1_76 = arith.constant 1 : index
        %c0_77 = arith.constant 0 : index
        %c0_78 = arith.constant 0 : index
        %131 = vector.load %arg6[%c1_76, %c0_77, %c0_78] : memref<2x64x128xbf16, #tpu.memory_space<vmem>>, vector<1x64x128xbf16>
        %132 = vector.shape_cast %131 : vector<1x64x128xbf16> to vector<64x128xbf16>
        %c1_79 = arith.constant 1 : index
        %c0_80 = arith.constant 0 : index
        %c0_81 = arith.constant 0 : index
        %133 = vector.load %arg7[%c1_79, %c0_80, %c0_81] : memref<2x1x128xf32, #tpu.memory_space<vmem>>, vector<1x1x128xf32>
        %134 = vector.shape_cast %133 : vector<1x1x128xf32> to vector<1x128xf32>
        %cst_82 = arith.constant dense<0.000000e+00> : vector<8x128xf32>
        %135 = tpu.matmul %130, %132, %cst_82 {dimension_numbers = #tpu.dot_dimension_numbers<[1], [0], [0], [1], [0, 0, 1, 1], [], []>} : vector<8x64xbf16>, vector<64x128xbf16>, vector<8x128xf32> -> vector<8x128xf32>
        %136 = vector.broadcast %134 : vector<1x128xf32> to vector<8x128xf32>
        %137 = arith.addf %135, %136 : vector<8x128xf32>
        %138 = vector.extract_strided_slice %137 {offsets = [0, 0], sizes = [8, 32], strides = [1, 1]} : vector<8x128xf32> to vector<8x32xf32>
        %139 = arith.negf %138 : vector<8x32xf32>
        %140 = math.exp %139 : vector<8x32xf32>
        %cst_83 = arith.constant 1.000000e+00 : f32
        %141 = vector.broadcast %cst_83 : f32 to vector<8x32xf32>
        %142 = arith.addf %141, %140 : vector<8x32xf32>
        %143 = arith.divf %141, %142 : vector<8x32xf32>
        %144 = vector.extract_strided_slice %137 {offsets = [0, 32], sizes = [8, 32], strides = [1, 1]} : vector<8x128xf32> to vector<8x32xf32>
        %145 = arith.negf %144 : vector<8x32xf32>
        %146 = math.exp %145 : vector<8x32xf32>
        %cst_84 = arith.constant 1.000000e+00 : f32
        %147 = vector.broadcast %cst_84 : f32 to vector<8x32xf32>
        %148 = arith.addf %147, %146 : vector<8x32xf32>
        %149 = arith.divf %147, %148 : vector<8x32xf32>
        %150 = vector.extract_strided_slice %137 {offsets = [0, 64], sizes = [8, 32], strides = [1, 1]} : vector<8x128xf32> to vector<8x32xf32>
        %151 = vector.extract_strided_slice %137 {offsets = [0, 96], sizes = [8, 32], strides = [1, 1]} : vector<8x128xf32> to vector<8x32xf32>
        %152 = arith.mulf %143, %151 : vector<8x32xf32>
        %153 = arith.addf %150, %152 : vector<8x32xf32>
        %154 = math.tanh %153 : vector<8x32xf32>
        %cst_85 = arith.constant 1.000000e+00 : f32
        %155 = vector.broadcast %cst_85 : f32 to vector<8x32xf32>
        %156 = arith.subf %155, %149 : vector<8x32xf32>
        %157 = arith.mulf %156, %154 : vector<8x32xf32>
        %158 = arith.mulf %149, %128 : vector<8x32xf32>
        %159 = arith.addf %157, %158 : vector<8x32xf32>
        %c2_86 = arith.constant 2 : index
        %c0_87 = arith.constant 0 : index
        %c0_88 = arith.constant 0 : index
        %160 = vector.load %arg12[%c2_86, %c0_87, %c0_88] : memref<3x8x32xf32, #tpu.memory_space<vmem>>, vector<1x8x32xf32>
        %161 = vector.shape_cast %160 : vector<1x8x32xf32> to vector<8x32xf32>
        %162 = vector.shape_cast %159 : vector<8x32xf32> to vector<1x8x32xf32>
        tpu.vector_store %arg12[%c2_86, %c0_87, %c0_88], %162 {strides = array<i32>} : memref<3x8x32xf32, #tpu.memory_space<vmem>>, vector<1x8x32xf32>,
        %163 = arith.truncf %159 : vector<8x32xf32> to vector<8x32xbf16>
        %c0_89 = arith.constant 0 : index
        %c0_90 = arith.constant 0 : index
        %164 = vector.load %arg8[%c0_89, %c0_90] : memref<32x128xbf16, #tpu.memory_space<vmem>>, vector<32x128xbf16>
        %cst_91 = arith.constant dense<0.000000e+00> : vector<8x128xf32>
        %165 = tpu.matmul %163, %164, %cst_91 {dimension_numbers = #tpu.dot_dimension_numbers<[1], [0], [0], [1], [0, 0, 1, 1], [], []>} : vector<8x32xbf16>, vector<32x128xbf16>, vector<8x128xf32> -> vector<8x128xf32>
        %c0_92 = arith.constant 0 : index
        %c0_93 = arith.constant 0 : index
        %166 = vector.load %arg9[%c0_92, %c0_93] : memref<1x128xf32, #tpu.memory_space<vmem>>, vector<1x128xf32>
        %167 = vector.broadcast %166 : vector<1x128xf32> to vector<8x128xf32>
        %168 = arith.addf %165, %167 : vector<8x128xf32>
        %cst_94 = arith.constant dense<0xFF800000> : vector<8xf32>
        %169 = vector.multi_reduction <maximumf>, %168, %cst_94 [1] : vector<8x128xf32> to vector<8xf32>
        %170 = vector.shape_cast %169 : vector<8xf32> to vector<8x1xf32>
        %171 = vector.broadcast %170 : vector<8x1xf32> to vector<8x128xf32>
        %172 = arith.cmpf oeq, %168, %171 : vector<8x128xf32>
        %c128_i32 = arith.constant 128 : i32
        %173 = vector.broadcast %c128_i32 : i32 to vector<8x128xi32>
        %174 = arith.select %172, %28, %173 : vector<8x128xi1>, vector<8x128xi32>
        %cst_95 = arith.constant dense<2147483647> : vector<8xi32>
        %175 = vector.multi_reduction <minsi>, %174, %cst_95 [1] : vector<8x128xi32> to vector<8xi32>
        %c1_i32_96 = arith.constant 1 : i32
        %176 = vector.broadcast %c1_i32_96 : i32 to vector<8xi32>
        %177 = arith.cmpi eq, %48, %176 : vector<8xi32>
        %c0_i32_97 = arith.constant 0 : i32
        %178 = vector.broadcast %c0_i32_97 : i32 to vector<8xi32>
        %179 = arith.select %177, %178, %175 : vector<8xi1>, vector<8xi32>
        %180 = vector.shape_cast %179 : vector<8xi32> to vector<1x8xi32>
        %181 = arith.index_cast %31 : i32 to index
        %c0_98 = arith.constant 0 : index
        %182 = vector.load %arg10[%181, %c0_98] : memref<12x8xi32, #tpu.memory_space<vmem>>, vector<1x8xi32>
        tpu.vector_store %arg10[%181, %c0_98], %180 {strides = array<i32>} : memref<12x8xi32, #tpu.memory_space<vmem>>, vector<1x8xi32>,
        %c0_i32_99 = arith.constant 0 : i32
        %183 = vector.broadcast %c0_i32_99 : i32 to vector<8xi32>
        %184 = arith.cmpi eq, %48, %183 : vector<8xi32>
        %c2_i32 = arith.constant 2 : i32
        %185 = vector.broadcast %c2_i32 : i32 to vector<8xi32>
        %186 = arith.cmpi eq, %175, %185 : vector<8xi32>
        %187 = arith.andi %184, %186 : vector<8xi1>
        %188 = vector.shape_cast %187 : vector<8xi1> to vector<1x8xi1>
        %c1_i32_100 = arith.constant 1 : i32
        %189 = arith.addi %31, %c1_i32_100 : i32
        %c0_101 = arith.constant 0 : index
        %c0_102 = arith.constant 0 : index
        %190 = vector.load %arg11[%c0_101, %c0_102] : memref<1x8xi32, #tpu.memory_space<vmem>>, vector<1x8xi32>
        %191 = vector.broadcast %189 : i32 to vector<1x8xi32>
        %192 = arith.select %188, %191, %190 : vector<1x8xi1>, vector<1x8xi32>
        %c0_103 = arith.constant 0 : index
        %c0_104 = arith.constant 0 : index
        %193 = vector.load %arg11[%c0_103, %c0_104] : memref<1x8xi32, #tpu.memory_space<vmem>>, vector<1x8xi32>
        tpu.vector_store %arg11[%c0_103, %c0_104], %192 {strides = array<i32>} : memref<1x8xi32, #tpu.memory_space<vmem>>, vector<1x8xi32>,
        %194 = vector.shape_cast %187 : vector<8xi1> to vector<1x8xi1>
        %c0_105 = arith.constant 0 : index
        %c0_106 = arith.constant 0 : index
        %195 = vector.load %arg14[%c0_105, %c0_106] : memref<1x8xi32, #tpu.memory_space<vmem>>, vector<1x8xi32>
        %c1_i32_107 = arith.constant 1 : i32
        %196 = vector.broadcast %c1_i32_107 : i32 to vector<1x8xi32>
        %197 = arith.select %194, %196, %195 : vector<1x8xi1>, vector<1x8xi32>
        %c0_108 = arith.constant 0 : index
        %c0_109 = arith.constant 0 : index
        %198 = vector.load %arg14[%c0_108, %c0_109] : memref<1x8xi32, #tpu.memory_space<vmem>>, vector<1x8xi32>
        tpu.vector_store %arg14[%c0_108, %c0_109], %197 {strides = array<i32>} : memref<1x8xi32, #tpu.memory_space<vmem>>, vector<1x8xi32>,
        %199 = vector.shape_cast %175 : vector<8xi32> to vector<1x8xi32>
        %c0_110 = arith.constant 0 : index
        %c0_111 = arith.constant 0 : index
        %200 = vector.load %arg13[%c0_110, %c0_111] : memref<1x8xi32, #tpu.memory_space<vmem>>, vector<1x8xi32>
        tpu.vector_store %arg13[%c0_110, %c0_111], %199 {strides = array<i32>} : memref<1x8xi32, #tpu.memory_space<vmem>>, vector<1x8xi32>,
      } else {
      }
    }
    %c11_i32_25 = arith.constant 11 : i32
    return
  }
}

</mosaic_0001>

<llo_original>
// kernel: tpu_custom_call.1
$region0: #{tpu_custom_call.1}
  #allocation0 [shape = 'u32[]', space=smem, size = 0x4, offset = 0x4, fixed_abs, tag = 'smem constant byte address 0x4 - core index']
  #allocation1 [shape = 'u32[72,128]{1,0:T(1,128)}', space=vmem, size = 0x9000, scoped, tag = 'internal scratch']
  #allocation2 [shape = 'f32[3,8,32]{2,1,0:T(8,128)}', space=vmem, size = 0x3000, scoped, tag = 'scratch operand']
  #allocation3 [shape = 's32[1,8]{1,0:T(1,128)}', space=vmem, size = 0x200, scoped, tag = 'scratch operand']
  #allocation4 [shape = 's32[1,8]{1,0:T(1,128)}', space=vmem, size = 0x200, scoped, tag = 'scratch operand']
  %s0 = inlined_call_operand.vmem [shape: f32[8,16], index: 0, kind: input, shape index: {}]
  %s1 = inlined_call_operand.hbm [shape: f32[16,32], index: 1, kind: input, shape index: {}]
  %s2 = inlined_call_operand.vmem [shape: f32[1,32], index: 2, kind: input, shape index: {}]
  %s3 = inlined_call_operand.vmem [shape: bf16[128,16], index: 3, kind: input, shape index: {}]
  %s4 = inlined_call_operand.hbm [shape: bf16[48,128], index: 4, kind: input, shape index: {}]
  %s5 = inlined_call_operand.vmem [shape: f32[1,128], index: 5, kind: input, shape index: {}]
  %s6 = inlined_call_operand.vmem [shape: bf16[2,64,128], index: 6, kind: input, shape index: {}]
  %s7 = inlined_call_operand.vmem [shape: f32[2,1,128], index: 7, kind: input, shape index: {}]
  %s8 = inlined_call_operand.hbm [shape: bf16[32,128], index: 8, kind: input, shape index: {}]
  %s9 = inlined_call_operand.vmem [shape: f32[1,128], index: 9, kind: input, shape index: {}]
  %s10 = inlined_call_operand.vmem [shape: s32[12,8], index: 10, kind: output, shape index: {0}]
  %s11 = inlined_call_operand.hbm [shape: s32[1,8], index: 11, kind: output, shape index: {1}]
  %12 = xla_tuple %s10, %s11
  %s13 = sld [smem:[#allocation0]]
  $region81: #{tpu_custom_call.1} parent=0
    _
  %s15 = ssub.s32 1, %s13
  %s16 = scalar_select 0, %s15, %s13
  $region1: #{tpu_custom_call.1} parent=0
    #allocation5 [shape = 'u8[8192]{0}', space=vmem, size = 0x2000, scoped, tag = 'input window, operand 1, single buffered']
    #allocation6 [shape = 's32[1]{0}', space=sflag, size = 0x4, scoped, tag = 'scoped memory for tpu_custom_call.1']
    #allocation7 [shape = 's32[1]{0}', space=sflag, size = 0x4, scoped, tag = 'scoped memory for tpu_custom_call.1']
    #allocation8 [shape = 'u8[12288]{0}', space=vmem, size = 0x3000, scoped, tag = 'input window, operand 4, single buffered']
    #allocation9 [shape = 's32[1]{0}', space=sflag, size = 0x4, scoped, tag = 'scoped memory for tpu_custom_call.1']
    #allocation10 [shape = 'u8[8192]{0}', space=vmem, size = 0x2000, scoped, tag = 'input window, operand 8, single buffered']
    #allocation11 [shape = 'u8[512]{0}', space=vmem, size = 0x400, scoped, tag = 'output window, operand 1, single buffered']
    %17 = vsyncpa [#allocation6], 0
    %18 = vsyncpa [#allocation9], 0
    %19 = vsyncpa [#allocation7], 0
    // Predicated region
    $region2: #{tpu_custom_call.1} parent=1 // pred_check
      _
    $region3: #{tpu_custom_call.1} parent=1 // pred_check_branch
      %21 = sbr.rel (0) target = $region5
    $region4: #{tpu_custom_call.1} parent=1 // pred_region
      _
    $region5: #{tpu_custom_call.1} parent=1 // pred_fallthru
      _
    // Predicated region
    $region6: #{tpu_custom_call.1} parent=1 // pred_check
      _
    $region7: #{tpu_custom_call.1} parent=1 // pred_check_branch
      %23 = sbr.rel (0) target = $region9
    $region8: #{tpu_custom_call.1} parent=1 // pred_region
      %25 = vsyncadd [#allocation6], 0
      %s26 = sshll.u32 %s1, 4
      %s27 = int_to_ptr.hbm [resolvable:$true] %s26
      %s28 = sshll.u32 [#allocation5], 4
      %s29 = int_to_ptr.vmem [resolvable:$true] %s28
      %34 = dma.hbm_to_vmem [thread:$0]  %s27, 256, %s29, [#allocation6], 128, 128, 8
    $region9: #{tpu_custom_call.1} parent=1 // pred_fallthru
      _
    // Predicated region
    $region10: #{tpu_custom_call.1} parent=1 // pred_check
      _
    $region11: #{tpu_custom_call.1} parent=1 // pred_check_branch
      %36 = sbr.rel (0) target = $region13
    $region12: #{tpu_custom_call.1} parent=1 // pred_region
      _
    $region13: #{tpu_custom_call.1} parent=1 // pred_fallthru
      _
    // Predicated region
    $region14: #{tpu_custom_call.1} parent=1 // pred_check
      _
    $region15: #{tpu_custom_call.1} parent=1 // pred_check_branch
      %38 = sbr.rel (0) target = $region17
    $region16: #{tpu_custom_call.1} parent=1 // pred_region
      _
    $region17: #{tpu_custom_call.1} parent=1 // pred_fallthru
      _
    // Predicated region
    $region18: #{tpu_custom_call.1} parent=1 // pred_check
      _
    $region19: #{tpu_custom_call.1} parent=1 // pred_check_branch
      %40 = sbr.rel (0) target = $region21
    $region20: #{tpu_custom_call.1} parent=1 // pred_region
      %42 = vsyncadd [#allocation9], 0
      %s43 = sshll.u32 %s4, 4
      %s44 = int_to_ptr.hbm [resolvable:$true] %s43
      %s45 = sshll.u32 [#allocation8], 4
      %s46 = int_to_ptr.vmem [resolvable:$true] %s45
      %51 = dma.hbm_to_vmem [thread:$0]  %s44, 384, %s46, [#allocation9], 64, 64, 4
    $region21: #{tpu_custom_call.1} parent=1 // pred_fallthru
      _
    // Predicated region
    $region22: #{tpu_custom_call.1} parent=1 // pred_check
      _
    $region23: #{tpu_custom_call.1} parent=1 // pred_check_branch
      %53 = sbr.rel (0) target = $region25
    $region24: #{tpu_custom_call.1} parent=1 // pred_region
      _
    $region25: #{tpu_custom_call.1} parent=1 // pred_fallthru
      _
    // Predicated region
    $region26: #{tpu_custom_call.1} parent=1 // pred_check
      _
    $region27: #{tpu_custom_call.1} parent=1 // pred_check_branch
      %55 = sbr.rel (0) target = $region29
    $region28: #{tpu_custom_call.1} parent=1 // pred_region
      _
    $region29: #{tpu_custom_call.1} parent=1 // pred_fallthru
      _
    // Predicated region
    $region30: #{tpu_custom_call.1} parent=1 // pred_check
      _
    $region31: #{tpu_custom_call.1} parent=1 // pred_check_branch
      %57 = sbr.rel (0) target = $region33
    $region32: #{tpu_custom_call.1} parent=1 // pred_region
      _
    $region33: #{tpu_custom_call.1} parent=1 // pred_fallthru
      _
    // Predicated region
    $region34: #{tpu_custom_call.1} parent=1 // pred_check
      _
    $region35: #{tpu_custom_call.1} parent=1 // pred_check_branch
      %59 = sbr.rel (0) target = $region37
    $region36: #{tpu_custom_call.1} parent=1 // pred_region
      %61 = vsyncadd [#allocation9], 0
      %s62 = sshll.u32 %s8, 4
      %s63 = int_to_ptr.hbm [resolvable:$true] %s62
      %s64 = sshll.u32 [#allocation10], 4
      %s65 = int_to_ptr.vmem [resolvable:$true] %s64
      %70 = dma.hbm_to_vmem [thread:$0]  %s63, 256, %s65, [#allocation9], 64, 64, 4
    $region37: #{tpu_custom_call.1} parent=1 // pred_fallthru
      _
    // Predicated region
    $region38: #{tpu_custom_call.1} parent=1 // pred_check
      _
    $region39: #{tpu_custom_call.1} parent=1 // pred_check_branch
      %72 = sbr.rel (0) target = $region41
    $region40: #{tpu_custom_call.1} parent=1 // pred_region
      _
    $region41: #{tpu_custom_call.1} parent=1 // pred_fallthru
      _
    // Predicated region
    $region42: #{tpu_custom_call.1} parent=1 // pred_check
      _
    $region43: #{tpu_custom_call.1} parent=1 // pred_check_branch
      %74 = sbr.rel (0) target = $region45
    $region44: #{tpu_custom_call.1} parent=1 // pred_region
      %76 = dma.done [#allocation6], 256
    $region45: #{tpu_custom_call.1} parent=1 // pred_fallthru
      _
    // Predicated region
    $region46: #{tpu_custom_call.1} parent=1 // pred_check
      _
    $region47: #{tpu_custom_call.1} parent=1 // pred_check_branch
      %78 = sbr.rel (0) target = $region49
    $region48: #{tpu_custom_call.1} parent=1 // pred_region
      %80 = dma.done [#allocation9], 384
    $region49: #{tpu_custom_call.1} parent=1 // pred_fallthru
      _
    // Predicated region
    $region50: #{tpu_custom_call.1} parent=1 // pred_check
      _
    $region51: #{tpu_custom_call.1} parent=1 // pred_check_branch
      %82 = sbr.rel (0) target = $region53
    $region52: #{tpu_custom_call.1} parent=1 // pred_region
      %84 = dma.done [#allocation9], 256
    $region53: #{tpu_custom_call.1} parent=1 // pred_fallthru
      _
    %v86 = vld [vmem:[%s0] sm:$0xff]
    %v87 = vld [vmem:[#allocation5] sm:$0xff]
    %v88 = vld [vmem:[#allocation5 + $0x8] sm:$0xff]
    %v89 = vld [vmem:[%s2] sm:$0x1]
    %v91 = vperm.slane %v89, 0
    %vm93 = vcmask 130048
    %v95 = vsel %vm93, %v86, 0
    %97 = vmatpush.msra.mxu0 0.0
    %98 = vmatpush.msra.mxu0 0.0
    %99 = vmatpush.msra.mxu0 0.0
    %100 = vmatpush.msra.mxu0 0.0
    %101 = vmatpush.msra.mxu0 0.0
    %102 = vmatpush.msra.mxu0 0.0
    %103 = vmatpush.msra.mxu0 0.0
    %104 = vmatpush.msra.mxu0 0.0
    %105 = vmatpush.msra.mxu0 0.0
    %106 = vmatpush.msra.mxu0 0.0
    %107 = vmatpush.msra.mxu0 0.0
    %108 = vmatpush.msra.mxu0 0.0
    %109 = vmatpush.msra.mxu0 0.0
    %110 = vmatpush.msra.mxu0 0.0
    %111 = vmatpush.msra.mxu0 %v88
    %112 = vmatpush.msra.mxu0 %v87
    %113 = vmatmul.f32.gmra.mxu0 %v95
    %v114 = vpop.f32.mrf.mxu0
    %v115 = vadd.f32 %v91, %v114
    %116 = vdwg.mxu0
    %vm117 = vcmask 261120
    %118 = vst.msk [vmem:[#allocation2] sm:$0xff] %vm117, %v115
    %s119 = scalar_lea.vmem [#allocation2], 8
    %120 = vst.msk [vmem:[%s119] sm:$0xff] %vm117, %v115
    %s121 = scalar_lea.vmem [#allocation2], 16
    %122 = vst.msk [vmem:[%s121] sm:$0xff] %vm117, %v115
    %vm123 = vcmask 57344
    %124 = vst.msk [vmem:[#allocation3] sm:$0x1] %vm123, 1
    %125 = vst.msk [vmem:[#allocation4] sm:$0x1] %vm123, 0
    %126 = vst.msk [vmem:[#allocation11] sm:$0x1] %vm123, 12
    %v127 = vlaneseq
    %v128 = vshrl.u32 %v127, 7
    %v129 = vadd.s32 %v128, 8
    %vm130 = vcmp.eq.s32.totalorder %v128, 0
    %vm131 = vcmp.eq.s32.totalorder %v129, 0
    %v132 = vsel %vm130, 1, 0
    %v133 = vsel %vm131, 1, 0
    %vm134 = vcmask 64512
    %135 = vst.msk [vmem:[%s10] sm:$0xff] %vm134, %v132
    %vm136 = vcmask 60416
    %137 = vst.msk [vmem:[%s10 + $0x8] sm:$0xf] %vm136, %v133
    %v138 = vlaneseq
    %v139 = vand.u32 %v138, 127
    loop: start=0, step=1, limit=11
    $region54: #{tpu_custom_call.1} parent=1 // loop_pre_header
      _
    $region55: #{tpu_custom_call.1} parent=1 // loop_header
      %s141 = sphi 0, %s145
      %p142 = scmp.ge.s32.totalorder %s141, 11
    $region56: #{tpu_custom_call.1} parent=1 // loop_header_branch
      %144 = sbr.rel (%p142) target = $region60
    $region57: #{tpu_custom_call.1} parent=1 // loop_body
      %s146 = sadd.s32 %s141, 1
      %v147 = vld [vmem:[#allocation4] sm:$0x1]
      %vm148 = vcmp.eq.s32.totalorder %v147, 0
      %v149 = vsel %vm148, 1.0, 0.0
      %v150 = vsel %vm123, %v149, -inf
      %151 = vmax.xlane.f32.xlu0 %v150
      %v152 = vpop.xlane.xlu0 %151
      %v153 = vrot.slane %v152, 4
      %v154 = vmax.f32 %v152, %v153
      %v155 = vrot.slane %v154, 2
      %v156 = vmax.f32 %v154, %v155
      %v157 = vrot.slane %v156, 1
      %v158 = vmax.f32 %v156, %v157
      %s159 = vtos %v158
      %p160 = scmp.gt.f32.partialorder %s159, 0.0
      // Predicated region
      $region61: #{tpu_custom_call.1} parent=57 // pred_check
        %p161 = pneg %p160
      $region62: #{tpu_custom_call.1} parent=57 // pred_check_branch
        %163 = sbr.rel (%p161) target = $region64
      $region63: #{tpu_custom_call.1} parent=57 // pred_region
        %v164 = vld [vmem:[#allocation3] sm:$0x1]
        %v165 = vld [vmem:[#allocation4] sm:$0x1]
        %v166 = vperm.slane %v164, 0
        %v167 = vlaneseq
        %v168 = vshrl.u32 %v167, 7
        %170 = vset.pattern.permute.xlu0 %v168
        %171 = vperm.xlu0 %170, %v166
        %v172 = vpop.permute.xlu0 %171
        %vm173 = vcmp.eq.s32.totalorder %v172, %v139
        %v174 = vsel %vm173, 1, 0
        %v175 = vcvt.s32.f32 %v174
        %v176 = vpack.c.bf16 %v175, %v175
        %v177 = vld [vmem:[%s3] sm:$0xf]
        %v178 = vld [vmem:[%s3 + $0x4] sm:$0xf]
        %v179 = vld [vmem:[%s3 + $0x8] sm:$0xf]
        %v180 = vld [vmem:[%s3 + $0xc] sm:$0xf]
        %v181 = vld [vmem:[%s3 + $0x10] sm:$0xf]
        %v182 = vld [vmem:[%s3 + $0x14] sm:$0xf]
        %v183 = vld [vmem:[%s3 + $0x18] sm:$0xf]
        %v184 = vld [vmem:[%s3 + $0x1c] sm:$0xf]
        %v185 = vld [vmem:[%s3 + $0x20] sm:$0xf]
        %v186 = vld [vmem:[%s3 + $0x24] sm:$0xf]
        %v187 = vld [vmem:[%s3 + $0x28] sm:$0xf]
        %v188 = vld [vmem:[%s3 + $0x2c] sm:$0xf]
        %v189 = vld [vmem:[%s3 + $0x30] sm:$0xf]
        %v190 = vld [vmem:[%s3 + $0x34] sm:$0xf]
        %v191 = vld [vmem:[%s3 + $0x38] sm:$0xf]
        %v192 = vld [vmem:[%s3 + $0x3c] sm:$0xf]
        %v209 = vunpack.c.l.b16 %v177
        %v210 = vunpack.c.l.b16 %v178
        %v211 = vunpack.c.l.b16 %v179
        %v212 = vunpack.c.l.b16 %v180
        %v213 = vunpack.c.l.b16 %v181
        %v214 = vunpack.c.l.b16 %v182
        %v215 = vunpack.c.l.b16 %v183
        %v216 = vunpack.c.l.b16 %v184
        %v217 = vunpack.c.l.b16 %v185
        %v218 = vunpack.c.l.b16 %v186
        %v219 = vunpack.c.l.b16 %v187
        %v220 = vunpack.c.l.b16 %v188
        %v221 = vunpack.c.l.b16 %v189
        %v222 = vunpack.c.l.b16 %v190
        %v223 = vunpack.c.l.b16 %v191
        %v224 = vunpack.c.l.b16 %v192
        %v225 = vpack.c.b16 %v210, %v209
        %v226 = vpack.c.b16 %v212, %v211
        %v227 = vpack.c.b16 %v214, %v213
        %v228 = vpack.c.b16 %v216, %v215
        %v229 = vpack.c.b16 %v218, %v217
        %v230 = vpack.c.b16 %v220, %v219
        %v231 = vpack.c.b16 %v222, %v221
        %v232 = vpack.c.b16 %v224, %v223
        %241 = vmatpush.bf16.msra.mxu0 %v232
        %242 = vmatpush.bf16.msra.mxu0 %v231
        %243 = vmatpush.bf16.msra.mxu0 %v230
        %244 = vmatpush.bf16.msra.mxu0 %v229
        %245 = vmatpush.bf16.msra.mxu0 %v228
        %246 = vmatpush.bf16.msra.mxu0 %v227
        %247 = vmatpush.bf16.msra.mxu0 %v226
        %248 = vmatpush.bf16.msra.mxu0 %v225
        %249 = vmatmul.bf16.gmra.mxu0 %v176
        %v250 = vpop.f32.mrf.mxu0
        %v251 = vadd.f32 0.0, %v250
        %v252 = vpop.f32.mrf.mxu0
        %253 = vdwg.mxu0
        %v254 = vld [vmem:[#allocation2] sm:$0xff]
        %256 = vrot.lane.b32.xlu0 %v254, 16
        %v257 = vpop.permute.xlu0 %256
        %v259 = vsel %vm93, %v251, %v257
        %v260 = vpack.c.bf16 %v259, %v259
        %v261 = vld [vmem:[#allocation8] sm:$0xf]
        %v262 = vld [vmem:[#allocation8 + $0x4] sm:$0xf]
        %v263 = vld [vmem:[#allocation8 + $0x8] sm:$0xf]
        %v264 = vld [vmem:[#allocation8 + $0xc] sm:$0xf]
        %v265 = vld [vmem:[#allocation8 + $0x10] sm:$0xf]
        %v266 = vld [vmem:[#allocation8 + $0x14] sm:$0xf]
        %v267 = vld [vmem:[%s5] sm:$0x1]
        %v269 = vperm.slane %v267, 0
        %v277 = vunpack.c.l.b16 %v261
        %v278 = vunpack.c.l.b16 %v262
        %v279 = vunpack.c.l.b16 %v263
        %v280 = vunpack.c.l.b16 %v264
        %v281 = vunpack.c.l.b16 %v265
        %v282 = vunpack.c.l.b16 %v266
        %v283 = vpack.c.b16 %v278, %v277
        %v284 = vpack.c.b16 %v280, %v279
        %v285 = vpack.c.b16 %v282, %v281
        %vm289 = vcmask 392192
        %v291 = vsel %vm289, %v260, 0
        %293 = vmatpush.bf16.msra.mxu0 0
        %294 = vmatpush.bf16.msra.mxu0 0
        %295 = vmatpush.bf16.msra.mxu0 0
        %296 = vmatpush.bf16.msra.mxu0 0
        %297 = vmatpush.bf16.msra.mxu0 0
        %298 = vmatpush.bf16.msra.mxu0 %v285
        %299 = vmatpush.bf16.msra.mxu0 %v284
        %300 = vmatpush.bf16.msra.mxu0 %v283
        %301 = vmatmul.bf16.gmra.mxu0 %v291
        %v302 = vpop.f32.mrf.mxu0
        %v303 = vadd.f32 %v269, %v302
        %v304 = vpop.f32.mrf.mxu0
        %305 = vdwg.mxu0
        %v306 = vxor.u32 %v303, 2147483648
        %v307 = vmul.f32 %v306, 1.442695
        %v308 = vpow.pop %v307
        %v309 = vadd.f32 %v308, 1.0
        %v310 = vrcp.pop %v309
        %v311 = vmul.f32 %v309, %v310
        %v312 = vsub.f32 1.0, %v311
        %v313 = vmul.f32 %v310, %v312
        %v314 = vadd.f32 %v310, %v313
        %vm315 = vweird.f32 %v309
        %vm316 = vweird.f32 %v310
        %vm317 = vmor %vm315, %vm316
        %v318 = vsel %vm317, %v310, %v314
        %v319 = vand.u32 2147483647, %v309
        %vm320 = vcmp.eq.f32.partialorder %v319, 8.507059e+37
        %v321 = vand.u32 %v309, 2147483648
        %v322 = vor.u32 1.1754944e-38, %v321
        %v323 = vsel %vm320, %v322, %v318
        %v324 = vmul.f32 1.0, %v323
        %326 = vrot.lane.b32.xlu0 %v303, 32
        %v327 = vpop.permute.xlu0 %326
        %v329 = vmul.f32 %v324, %v327
        %331 = vrot.lane.b32.xlu0 %v329, 64
        %v332 = vpop.permute.xlu0 %331
        %v334 = vadd.f32 %v303, %v332
        %v335 = vtanh.pop %v334
        %v336 = vsub.f32 1.0, %v324
        %338 = vrot.lane.b32.xlu0 %v335, 96
        %v339 = vpop.permute.xlu0 %338
        %v341 = vmul.f32 %v336, %v339
        %342 = vrot.lane.b32.xlu0 %v254, 32
        %v343 = vpop.permute.xlu0 %342
        %v345 = vmul.f32 %v324, %v343
        %v346 = vadd.f32 %v341, %v345
        %348 = vrot.lane.b32.xlu0 %v346, 96
        %v349 = vpop.permute.xlu0 %348
        %351 = vst.msk [vmem:[#allocation2] sm:$0xff] %vm117, %v349
        %v352 = vld [vmem:[%s119] sm:$0xff]
        %354 = vrot.lane.b32.xlu0 %v352, 32
        %v355 = vpop.permute.xlu0 %354
        %v357 = vsel %vm117, %v349, %v355
        %v358 = vpack.c.bf16 %v357, %v357
        %v359 = vld [vmem:[%s6] sm:$0xf]
        %v360 = vld [vmem:[%s6 + $0x4] sm:$0xf]
        %v361 = vld [vmem:[%s6 + $0x8] sm:$0xf]
        %v362 = vld [vmem:[%s6 + $0xc] sm:$0xf]
        %v363 = vld [vmem:[%s6 + $0x10] sm:$0xf]
        %v364 = vld [vmem:[%s6 + $0x14] sm:$0xf]
        %v365 = vld [vmem:[%s6 + $0x18] sm:$0xf]
        %v366 = vld [vmem:[%s6 + $0x1c] sm:$0xf]
        %v367 = vld [vmem:[%s7] sm:$0x1]
        %v369 = vperm.slane %v367, 0
        %v379 = vunpack.c.l.b16 %v359
        %v380 = vunpack.c.l.b16 %v360
        %v381 = vunpack.c.l.b16 %v361
        %v382 = vunpack.c.l.b16 %v362
        %v383 = vunpack.c.l.b16 %v363
        %v384 = vunpack.c.l.b16 %v364
        %v385 = vunpack.c.l.b16 %v365
        %v386 = vunpack.c.l.b16 %v366
        %v387 = vpack.c.b16 %v380, %v379
        %v388 = vpack.c.b16 %v382, %v381
        %v389 = vpack.c.b16 %v384, %v383
        %v390 = vpack.c.b16 %v386, %v385
        %vm395 = vcmask 523264
        %v397 = vsel %vm395, %v358, 0
        %399 = vmatpush.bf16.msra.mxu0 0
        %400 = vmatpush.bf16.msra.mxu0 0
        %401 = vmatpush.bf16.msra.mxu0 0
        %402 = vmatpush.bf16.msra.mxu0 0
        %403 = vmatpush.bf16.msra.mxu0 %v390
        %404 = vmatpush.bf16.msra.mxu0 %v389
        %405 = vmatpush.bf16.msra.mxu0 %v388
        %406 = vmatpush.bf16.msra.mxu0 %v387
        %407 = vmatmul.bf16.gmra.mxu0 %v397
        %v408 = vpop.f32.mrf.mxu0
        %v409 = vadd.f32 %v369, %v408
        %v410 = vpop.f32.mrf.mxu0
        %411 = vdwg.mxu0
        %v412 = vxor.u32 %v409, 2147483648
        %v413 = vmul.f32 %v412, 1.442695
        %v414 = vpow.pop %v413
        %v415 = vadd.f32 %v414, 1.0
        %v416 = vrcp.pop %v415
        %v417 = vmul.f32 %v415, %v416
        %v418 = vsub.f32 1.0, %v417
        %v419 = vmul.f32 %v416, %v418
        %v420 = vadd.f32 %v416, %v419
        %vm421 = vweird.f32 %v415
        %vm422 = vweird.f32 %v416
        %vm423 = vmor %vm421, %vm422
        %v424 = vsel %vm423, %v416, %v420
        %v425 = vand.u32 2147483647, %v415
        %vm426 = vcmp.eq.f32.partialorder %v425, 8.507059e+37
        %v427 = vand.u32 %v415, 2147483648
        %v428 = vor.u32 1.1754944e-38, %v427
        %v429 = vsel %vm426, %v428, %v424
        %v430 = vmul.f32 1.0, %v429
        %432 = vrot.lane.b32.xlu0 %v409, 32
        %v433 = vpop.permute.xlu0 %432
        %v435 = vmul.f32 %v430, %v433
        %437 = vrot.lane.b32.xlu0 %v435, 64
        %v438 = vpop.permute.xlu0 %437
        %v440 = vadd.f32 %v409, %v438
        %v441 = vtanh.pop %v440
        %v442 = vsub.f32 1.0, %v430
        %444 = vrot.lane.b32.xlu0 %v441, 96
        %v445 = vpop.permute.xlu0 %444
        %v447 = vmul.f32 %v442, %v445
        %v448 = vmul.f32 %v430, %v355
        %v449 = vadd.f32 %v447, %v448
        %451 = vrot.lane.b32.xlu0 %v449, 96
        %v452 = vpop.permute.xlu0 %451
        %454 = vst.msk [vmem:[%s119] sm:$0xff] %vm117, %v452
        %v455 = vld [vmem:[%s121] sm:$0xff]
        %457 = vrot.lane.b32.xlu0 %v455, 32
        %v458 = vpop.permute.xlu0 %457
        %v460 = vsel %vm117, %v452, %v458
        %v461 = vpack.c.bf16 %v460, %v460
        %s462 = scalar_lea.vmem %s6, 32
        %v463 = vld [vmem:[%s462] sm:$0xf]
        %v464 = vld [vmem:[%s462 + $0x4] sm:$0xf]
        %v465 = vld [vmem:[%s462 + $0x8] sm:$0xf]
        %v466 = vld [vmem:[%s462 + $0xc] sm:$0xf]
        %v467 = vld [vmem:[%s462 + $0x10] sm:$0xf]
        %v468 = vld [vmem:[%s462 + $0x14] sm:$0xf]
        %v469 = vld [vmem:[%s462 + $0x18] sm:$0xf]
        %v470 = vld [vmem:[%s462 + $0x1c] sm:$0xf]
        %s471 = scalar_lea.vmem %s7, 1
        %v472 = vld [vmem:[%s471] sm:$0x1]
        %v474 = vperm.slane %v472, 0
        %v484 = vunpack.c.l.b16 %v463
        %v485 = vunpack.c.l.b16 %v464
        %v486 = vunpack.c.l.b16 %v465
        %v487 = vunpack.c.l.b16 %v466
        %v488 = vunpack.c.l.b16 %v467
        %v489 = vunpack.c.l.b16 %v468
        %v490 = vunpack.c.l.b16 %v469
        %v491 = vunpack.c.l.b16 %v470
        %v492 = vpack.c.b16 %v485, %v484
        %v493 = vpack.c.b16 %v487, %v486
        %v494 = vpack.c.b16 %v489, %v488
        %v495 = vpack.c.b16 %v491, %v490
        %v501 = vsel %vm395, %v461, 0
        %503 = vmatpush.bf16.msra.mxu0 0
        %504 = vmatpush.bf16.msra.mxu0 0
        %505 = vmatpush.bf16.msra.mxu0 0
        %506 = vmatpush.bf16.msra.mxu0 0
        %507 = vmatpush.bf16.msra.mxu0 %v495
        %508 = vmatpush.bf16.msra.mxu0 %v494
        %509 = vmatpush.bf16.msra.mxu0 %v493
        %510 = vmatpush.bf16.msra.mxu0 %v492
        %511 = vmatmul.bf16.gmra.mxu0 %v501
        %v512 = vpop.f32.mrf.mxu0
        %v513 = vadd.f32 %v474, %v512
        %v514 = vpop.f32.mrf.mxu0
        %515 = vdwg.mxu0
        %v516 = vxor.u32 %v513, 2147483648
        %v517 = vmul.f32 %v516, 1.442695
        %v518 = vpow.pop %v517
        %v519 = vadd.f32 %v518, 1.0
        %v520 = vrcp.pop %v519
        %v521 = vmul.f32 %v519, %v520
        %v522 = vsub.f32 1.0, %v521
        %v523 = vmul.f32 %v520, %v522
        %v524 = vadd.f32 %v520, %v523
        %vm525 = vweird.f32 %v519
        %vm526 = vweird.f32 %v520
        %vm527 = vmor %vm525, %vm526
        %v528 = vsel %vm527, %v520, %v524
        %v529 = vand.u32 2147483647, %v519
        %vm530 = vcmp.eq.f32.partialorder %v529, 8.507059e+37
        %v531 = vand.u32 %v519, 2147483648
        %v532 = vor.u32 1.1754944e-38, %v531
        %v533 = vsel %vm530, %v532, %v528
        %v534 = vmul.f32 1.0, %v533
        %536 = vrot.lane.b32.xlu0 %v513, 32
        %v537 = vpop.permute.xlu0 %536
        %v539 = vmul.f32 %v534, %v537
        %541 = vrot.lane.b32.xlu0 %v539, 64
        %v542 = vpop.permute.xlu0 %541
        %v544 = vadd.f32 %v513, %v542
        %v545 = vtanh.pop %v544
        %v546 = vsub.f32 1.0, %v534
        %548 = vrot.lane.b32.xlu0 %v545, 96
        %v549 = vpop.permute.xlu0 %548
        %v551 = vmul.f32 %v546, %v549
        %v552 = vmul.f32 %v534, %v458
        %v553 = vadd.f32 %v551, %v552
        %555 = vrot.lane.b32.xlu0 %v553, 96
        %v556 = vpop.permute.xlu0 %555
        %558 = vst.msk [vmem:[%s121] sm:$0xff] %vm117, %v556
        %v559 = vpack.c.bf16 %v553, %v553
        %v560 = vld [vmem:[#allocation10] sm:$0xf]
        %v561 = vld [vmem:[#allocation10 + $0x4] sm:$0xf]
        %v562 = vld [vmem:[#allocation10 + $0x8] sm:$0xf]
        %v563 = vld [vmem:[#allocation10 + $0xc] sm:$0xf]
        %v564 = vld [vmem:[%s9] sm:$0x1]
        %v566 = vperm.slane %v564, 0
        %569 = vrot.lane.b32.xlu0 %v559, 96
        %v570 = vpop.permute.xlu0 %569
        %v575 = vunpack.c.l.b16 %v560
        %v576 = vunpack.c.l.b16 %v561
        %v577 = vunpack.c.l.b16 %v562
        %v578 = vunpack.c.l.b16 %v563
        %v579 = vpack.c.b16 %v576, %v575
        %v580 = vpack.c.b16 %v578, %v577
        %v584 = vsel %vm117, %v570, 0
        %586 = vmatpush.bf16.msra.mxu0 0
        %587 = vmatpush.bf16.msra.mxu0 0
        %588 = vmatpush.bf16.msra.mxu0 0
        %589 = vmatpush.bf16.msra.mxu0 0
        %590 = vmatpush.bf16.msra.mxu0 0
        %591 = vmatpush.bf16.msra.mxu0 0
        %592 = vmatpush.bf16.msra.mxu0 %v580
        %593 = vmatpush.bf16.msra.mxu0 %v579
        %594 = vmatmul.bf16.gmra.mxu0 %v584
        %v595 = vpop.f32.mrf.mxu0
        %v596 = vadd.f32 %v566, %v595
        %v597 = vpop.f32.mrf.mxu0
        %598 = vdwg.mxu0
        %599 = vmax.xlane.f32.xlu0 %v596
        %v600 = vpop.xlane.xlu0 %599
        %vm601 = vcmp.eq.f32.partialorder %v596, %v600
        %v602 = vsel %vm601, %v139, 128
        %v603 = vand.u32 %v602, 65535
        %v604 = vshra.s32 %v602, 16
        %v605 = vcvt.s32.f32 %v603
        %v606 = vcvt.s32.f32 %v604
        %607 = vmin.xlane.f32.xlu0 %v606
        %v608 = vpop.xlane.xlu0 %607
        %vm609 = vcmp.eq.f32.partialorder %v606, %v608
        %v610 = vsel %vm609, %v605, inf
        %611 = vmin.xlane.f32.xlu0 %v610
        %v612 = vpop.xlane.xlu0 %611
        %v613 = vcvt.f32.s32 %v612
        %v614 = vcvt.f32.s32 %v608
        %v615 = vshll.u32 %v614, 16
        %v616 = vadd.s32 %v615, %v613
        %vm617 = vcmp.eq.s32.totalorder %v165, 1
        %v618 = vperm.slane %v616, 0
        %v619 = vperm.slane %v616, 1
        %v620 = vperm.slane %v616, 2
        %v621 = vperm.slane %v616, 3
        %v622 = vperm.slane %v616, 4
        %v623 = vperm.slane %v616, 5
        %v624 = vperm.slane %v616, 6
        %v625 = vperm.slane %v616, 7
        %626 = vst [vmem:[#allocation1] ss:$9 sm:$0xff] %v618
        %s627 = scalar_lea.vmem [#allocation1], 1
        %628 = vst [vmem:[%s627] ss:$9 sm:$0xff] %v619
        %s629 = scalar_lea.vmem [#allocation1], 2
        %630 = vst [vmem:[%s629] ss:$9 sm:$0xff] %v620
        %s631 = scalar_lea.vmem [#allocation1], 3
        %632 = vst [vmem:[%s631] ss:$9 sm:$0xff] %v621
        %s633 = scalar_lea.vmem [#allocation1], 4
        %634 = vst [vmem:[%s633] ss:$9 sm:$0xff] %v622
        %s635 = scalar_lea.vmem [#allocation1], 5
        %636 = vst [vmem:[%s635] ss:$9 sm:$0xff] %v623
        %s637 = scalar_lea.vmem [#allocation1], 6
        %638 = vst [vmem:[%s637] ss:$9 sm:$0xff] %v624
        %s639 = scalar_lea.vmem [#allocation1], 7
        %640 = vst [vmem:[%s639] ss:$9 sm:$0xff] %v625
        %v641 = vld [vmem:[#allocation1] sm:$0xff]
        %642 = vset.pattern.permute.xlu0 0
        %643 = vperm.xlu0 %642, %v641
        %v644 = vpop.permute.xlu0 %643
        %v645 = vperm.slane %v644, %v139
        %v646 = vsel %vm617, 0, %v645
        %s647 = scalar_lea.vmem %s10, %s146
        %648 = vst.msk [vmem:[%s647] sm:$0x1] %vm123, %v646
        %vm649 = vcmp.eq.s32.totalorder %v165, 0
        %vm650 = vcmp.eq.s32.totalorder %v616, 2
        %v651 = vsel %vm650, 1, 0
        %v652 = vperm.slane %v651, 0
        %v653 = vperm.slane %v651, 1
        %v654 = vperm.slane %v651, 2
        %v655 = vperm.slane %v651, 3
        %v656 = vperm.slane %v651, 4
        %v657 = vperm.slane %v651, 5
        %v658 = vperm.slane %v651, 6
        %v659 = vperm.slane %v651, 7
        %660 = vst [vmem:[#allocation1] ss:$9 sm:$0xff] %v652
        %s661 = scalar_lea.vmem [#allocation1], 1
        %662 = vst [vmem:[%s661] ss:$9 sm:$0xff] %v653
        %s663 = scalar_lea.vmem [#allocation1], 2
        %664 = vst [vmem:[%s663] ss:$9 sm:$0xff] %v654
        %s665 = scalar_lea.vmem [#allocation1], 3
        %666 = vst [vmem:[%s665] ss:$9 sm:$0xff] %v655
        %s667 = scalar_lea.vmem [#allocation1], 4
        %668 = vst [vmem:[%s667] ss:$9 sm:$0xff] %v656
        %s669 = scalar_lea.vmem [#allocation1], 5
        %670 = vst [vmem:[%s669] ss:$9 sm:$0xff] %v657
        %s671 = scalar_lea.vmem [#allocation1], 6
        %672 = vst [vmem:[%s671] ss:$9 sm:$0xff] %v658
        %s673 = scalar_lea.vmem [#allocation1], 7
        %674 = vst [vmem:[%s673] ss:$9 sm:$0xff] %v659
        %v675 = vld [vmem:[#allocation1] sm:$0xff]
        %676 = vset.pattern.permute.xlu0 0
        %677 = vperm.xlu0 %676, %v675
        %v678 = vpop.permute.xlu0 %677
        %v679 = vperm.slane %v678, %v139
        %vm680 = vcmp.ne.s32.totalorder %v679, 0
        %vm681 = vmand %vm649, %vm680
        %s682 = sadd.s32 %s141, 2
        %v683 = vld [vmem:[#allocation11] sm:$0x1]
        %v684 = vstv %s682
        %v685 = vsel %vm681, %v684, %v683
        %686 = vst.msk [vmem:[#allocation11] sm:$0x1] %vm123, %v685
        %v687 = vld [vmem:[#allocation4] sm:$0x1]
        %v688 = vsel %vm681, 1, %v687
        %689 = vst.msk [vmem:[#allocation4] sm:$0x1] %vm123, %v688
        %v690 = vperm.slane %v616, %v139
        %691 = vst.msk [vmem:[#allocation3] sm:$0x1] %vm123, %v690
      $region64: #{tpu_custom_call.1} parent=57 // pred_fallthru
        _
    $region58: #{tpu_custom_call.1} parent=1 // loop_footer
      %s145 = sadd.s32 1, %s141
    $region59: #{tpu_custom_call.1} parent=1 // loop_footer_branch
      %140 = sbr.rel target = $region55
    $region60: #{tpu_custom_call.1} parent=1 // loop_exit
      _
    // Predicated region
    $region65: #{tpu_custom_call.1} parent=1 // pred_check
      _
    $region66: #{tpu_custom_call.1} parent=1 // pred_check_branch
      %693 = sbr.rel (0) target = $region68
    $region67: #{tpu_custom_call.1} parent=1 // pred_region
      _
    $region68: #{tpu_custom_call.1} parent=1 // pred_fallthru
      _
    // Predicated region
    $region69: #{tpu_custom_call.1} parent=1 // pred_check
      _
    $region70: #{tpu_custom_call.1} parent=1 // pred_check_branch
      %695 = sbr.rel (0) target = $region72
    $region71: #{tpu_custom_call.1} parent=1 // pred_region
      %697 = vsyncadd [#allocation7], 0
      %s699 = sshll.u32 [#allocation11], 4
      %s700 = int_to_ptr.vmem [resolvable:$true] %s699
      %s701 = sshll.u32 %s11, 4
      %s702 = int_to_ptr.hbm [resolvable:$true] %s701
      %704 = dma.vmem_to_hbm [thread:$0]  %s700, 16, %s702, [#allocation7]
    $region72: #{tpu_custom_call.1} parent=1 // pred_fallthru
      _
    // Predicated region
    $region73: #{tpu_custom_call.1} parent=1 // pred_check
      _
    $region74: #{tpu_custom_call.1} parent=1 // pred_check_branch
      %706 = sbr.rel (0) target = $region76
    $region75: #{tpu_custom_call.1} parent=1 // pred_region
      _
    $region76: #{tpu_custom_call.1} parent=1 // pred_fallthru
      _
    // Predicated region
    $region77: #{tpu_custom_call.1} parent=1 // pred_check
      _
    $region78: #{tpu_custom_call.1} parent=1 // pred_check_branch
      %708 = sbr.rel (0) target = $region80
    $region79: #{tpu_custom_call.1} parent=1 // pred_region
      %710 = dma.done [#allocation7], 16
    $region80: #{tpu_custom_call.1} parent=1 // pred_fallthru
      _
    %711 = vsyncpa [#allocation6], 1
    %712 = vsyncpa [#allocation9], 1
    %713 = vsyncpa [#allocation7], 1

</llo_original>
